<compile_context>
chip_gen: v5e
topology: v5e:2x2
jax: 0.10.0
libtpu: 0.0.40
codegen_flags: <defaults>
</compile_context>

<pallas_src>
import functools

import jax
import jax.numpy as jnp
from jax.experimental import pallas as pl
from jax.experimental.pallas import tpu as pltpu


def _vq_kernel(x_ref, eaug_ref, et_ref, q_ref, sse_ref, xaug_ref):
    """One grid step: quantize one (C, TN) slab of z against the full codebook.

    x_ref:    (C, TN)        input slab (TN on the 128-lane axis)
    eaug_ref: (K, C+1)       augmented codebook [-2*E | ||e||^2]
    et_ref:   (C, K)         plain codebook, pre-transposed for the gather matmul
    q_ref:    (C, TN)        quantized output slab
    sse_ref:  (1, 1, 1, 128) per-step sum-of-squared-error partial (lane-dense)
    xaug_ref: (C+1, TN)      VMEM scratch holding [x ; 1]
    """
    x = x_ref[...]                                              # (C, TN) f32
    c, tn = x.shape

    # Augmented activations [x ; 1] so scale+bias ride the MXU contraction.
    xaug_ref[0:c, :] = x
    xaug_ref[c:c + 1, :] = jnp.ones((1, tn), jnp.float32)

    # dist = ||e||^2 - 2*e.x  (||x||^2 dropped: constant per column, argmin-safe)
    dist = jnp.dot(eaug_ref[...], xaug_ref[...],
                   preferred_element_type=jnp.float32)          # (K, TN)

    k = dist.shape[0]
    iota_k = jax.lax.broadcasted_iota(jnp.int32, dist.shape, 0)  # (K, TN)
    min_d = jnp.min(dist, axis=0, keepdims=True)                 # (1, TN)
    # First-index tie-break, matching torch.argmin.
    idx = jnp.min(jnp.where(dist == min_d, iota_k, k),
                  axis=0, keepdims=True)                         # (1, TN)
    onehot = (iota_k == idx).astype(jnp.float32)                 # (K, TN)

    # Gather selected codewords on the MXU: (C, K) @ (K, TN) -> (C, TN).
    q = jnp.dot(et_ref[...], onehot, preferred_element_type=jnp.float32)
    q_ref[...] = q.astype(q_ref.dtype)

    # ||q - x||^2 per column == min_d + ||x||^2  (since dist = ||e||^2 - 2 e.x).
    x_sq = jnp.sum(x * x, axis=0, keepdims=True)                 # (1, TN)
    total = jnp.sum(min_d + x_sq)                                # scalar partial
    sse_ref[...] = jnp.broadcast_to(total.reshape(1, 1, 1, 1), sse_ref.shape)


def _pick_tile_hw(hw, batch):
    """Spatial tile (lane axis).

    Capped at 512 so the (K, TN) f32 temporaries (dist / masked iota / onehot)
    stay near the vreg file instead of spilling (secondary bottleneck at large
    TN, worst on v5e's single vector-store slot).  Split further whenever the
    grid would otherwise have a single step, so v7x's second TensorCore gets
    work on small-batch inputs.
    """
    tile = hw
    if hw > 512:
        for t in (512, 256, 128):
            if hw % t == 0:
                tile = t
                break
    if batch * (hw // tile) < 2:
        for t in (tile // 2, 256, 128):
            if t >= 128 and t % 128 == 0 and tile % t == 0:
                tile = t
                break
    return tile


@functools.partial(jax.jit, static_argnames=("tile_hw",))
def vector_quantizer_forward(z, embedding_weight, tile_hw=None,
                             commitment_cost=0.25):
    """Pallas implementation of VectorQuantizer.forward.

    z:                 (B, C, H, W) float32  (NCHW, like the PyTorch module)
    embedding_weight:  (K, C)       float32  (nn.Embedding weight)

    Returns (quantized (B, C, H, W), loss scalar) with the same forward values
    as the PyTorch module.
    """
    B, C, H, W = z.shape
    K, Cd = embedding_weight.shape
    assert Cd == C
    HW = H * W

    if tile_hw is None:
        tile_hw = _pick_tile_hw(HW, B)
    assert HW % tile_hw == 0
    assert tile_hw == HW or tile_hw % 128 == 0
    num_tiles = HW // tile_hw

    # Free reshape only: NCHW -> (B, C, H*W); no HBM transpose of z.
    z_r = z.reshape(B, C, HW).astype(jnp.float32)
    e = embedding_weight.astype(jnp.float32)                  # (K, C)
    e_sq = jnp.sum(e * e, axis=1, keepdims=True)              # (K, 1)
    e_aug = jnp.concatenate([-2.0 * e, e_sq], axis=1)         # (K, C+1)
    e_t = e.T                                                 # (C, K)

    grid = (B, num_tiles)

    q_r, sse_tiles = pl.pallas_call(
        _vq_kernel,
        out_shape=(
            jax.ShapeDtypeStruct((B, C, HW), jnp.float32),
            jax.ShapeDtypeStruct((B, num_tiles, 1, 128), jnp.float32),
        ),
        grid_spec=pltpu.PrefetchScalarGridSpec(
            num_scalar_prefetch=0,
            grid=grid,
            in_specs=[
                pl.BlockSpec((None, C, tile_hw), lambda b, j: (b, 0, j)),   # z slab
                pl.BlockSpec((K, C + 1), lambda b, j: (0, 0)),              # [-2E | e_sq]
                pl.BlockSpec((C, K), lambda b, j: (0, 0)),                  # E^T
            ],
            out_specs=[
                pl.BlockSpec((None, C, tile_hw), lambda b, j: (b, 0, j)),   # quantized
                pl.BlockSpec((1, 1, 1, 128), lambda b, j: (b, j, 0, 0)),    # sse partial
            ],
            scratch_shapes=[pltpu.VMEM((C + 1, tile_hw), jnp.float32)],     # [x ; 1]
        ),
        compiler_params=pltpu.CompilerParams(
            dimension_semantics=("parallel", "parallel")),   # no accumulator -> both TCs on v7x
    )(z_r, e_aug, e_t)

    quantized = q_r.reshape(B, C, H, W)                      # free reshape back to NCHW

    sse = jnp.sum(sse_tiles[:, :, 0, 0])
    mse = sse / jnp.float32(B * C * H * W)
    # e_latent_loss == q_latent_loss == mse(quantized, z) in forward value.
    loss = (1.0 + commitment_cost) * mse

    # straight-through: quantized = z + (quantized - z).detach() -> value == quantized
    return quantized.astype(z.dtype), loss


def _reference_forward(z, embedding_weight):
    """Pure-JAX reference of the PyTorch forward, for a correctness check."""
    B, C, H, W = z.shape
    zf = jnp.transpose(z, (0, 2, 3, 1)).reshape(-1, C)
    d = (jnp.sum(zf ** 2, axis=1, keepdims=True)
         - 2.0 * zf @ embedding_weight.T
         + jnp.sum(embedding_weight ** 2, axis=1))
    idx = jnp.argmin(d, axis=1)
    q = embedding_weight[idx].reshape(B, H, W, C).transpose(0, 3, 1, 2)
    mse = jnp.mean((q - z) ** 2)
    return q, 1.25 * mse


if __name__ == "__main__":
    key = jax.random.PRNGKey(0)
    k_z, k_e = jax.random.split(key)

    B, C, H, W = 2, 4, 16, 16          # input (NCHW)
    num_embeddings = 64                 # K
    embedding_dim = C

    z = jax.random.normal(k_z, (B, C, H, W), dtype=jnp.float32)
    # nn.Embedding weight init: uniform(-1/K, 1/K), deterministic
    embedding_weight = jax.random.uniform(
        k_e, (num_embeddings, embedding_dim),
        minval=-1.0 / num_embeddings, maxval=1.0 / num_embeddings,
        dtype=jnp.float32)

    quantized, loss = vector_quantizer_forward(z, embedding_weight)
    quantized = jax.block_until_ready(quantized)
    loss = jax.block_until_ready(loss)

    # sanity-check against pure-JAX reference
    q_ref, loss_ref = _reference_forward(z, embedding_weight)
    assert quantized.shape == (B, C, H, W)
    assert jnp.allclose(quantized, q_ref, atol=1e-5, rtol=1e-5)
    assert jnp.allclose(loss, loss_ref, atol=1e-5, rtol=1e-5)

    print("KERNEL_OK")
</pallas_src>

<mosaic_0001>
module attributes {stable_mosaic.version = 11 : i64} {
  func.func @_vq_kernel(%arg0: i32, %arg1: i32, %arg2: memref<1x4x256xf32, #tpu.memory_space<vmem>>, %arg3: memref<64x5xf32, #tpu.memory_space<vmem>>, %arg4: memref<4x64xf32, #tpu.memory_space<vmem>>, %arg5: memref<1x4x256xf32, #tpu.memory_space<vmem>>, %arg6: memref<1x1x1x128xf32, #tpu.memory_space<vmem>>, %arg7: memref<5x256xf32, #tpu.memory_space<vmem>>) attributes {dimension_semantics = [#tpu.dimension_semantics<parallel>, #tpu.dimension_semantics<parallel>], iteration_bounds = array<i64: 2, 1>, scalar_prefetch = 0 : i64, scratch_operands = 1 : i64, tpu.core_type = #tpu.core_type<tc>, window_params = [{transform_indices = @transform_0, window_bounds = array<i64: 1, 4, 256>}, {pipeline_mode = #tpu.pipeline_mode<synchronous>, transform_indices = @transform_1, window_bounds = array<i64: 64, 5>}, {pipeline_mode = #tpu.pipeline_mode<synchronous>, transform_indices = @transform_2, window_bounds = array<i64: 4, 64>}, {transform_indices = @transform_3, window_bounds = array<i64: 1, 4, 256>}, {transform_indices = @transform_4, window_bounds = array<i64: 1, 1, 1, 128>}]} {
    %c0 = arith.constant 0 : index
    %c0_0 = arith.constant 0 : index
    %c0_1 = arith.constant 0 : index
    %0 = vector.load %arg2[%c0, %c0_0, %c0_1] : memref<1x4x256xf32, #tpu.memory_space<vmem>>, vector<1x4x256xf32>
    %1 = vector.shape_cast %0 : vector<1x4x256xf32> to vector<4x256xf32>
    %c0_2 = arith.constant 0 : index
    %c0_3 = arith.constant 0 : index
    %2 = vector.load %arg7[%c0_2, %c0_3] : memref<5x256xf32, #tpu.memory_space<vmem>>, vector<4x256xf32>
    tpu.vector_store %arg7[%c0_2, %c0_3], %1 {strides = array<i32>} : memref<5x256xf32, #tpu.memory_space<vmem>>, vector<4x256xf32>,
    %cst = arith.constant 1.000000e+00 : f32
    %3 = vector.broadcast %cst : f32 to vector<1x256xf32>
    %c4 = arith.constant 4 : index
    %c0_4 = arith.constant 0 : index
    %4 = vector.load %arg7[%c4, %c0_4] : memref<5x256xf32, #tpu.memory_space<vmem>>, vector<1x256xf32>
    tpu.vector_store %arg7[%c4, %c0_4], %3 {strides = array<i32>} : memref<5x256xf32, #tpu.memory_space<vmem>>, vector<1x256xf32>,
    %c0_5 = arith.constant 0 : index
    %c0_6 = arith.constant 0 : index
    %5 = vector.load %arg3[%c0_5, %c0_6] : memref<64x5xf32, #tpu.memory_space<vmem>>, vector<64x5xf32>
    %c0_7 = arith.constant 0 : index
    %c0_8 = arith.constant 0 : index
    %6 = vector.load %arg7[%c0_7, %c0_8] : memref<5x256xf32, #tpu.memory_space<vmem>>, vector<5x256xf32>
    %cst_9 = arith.constant dense<0.000000e+00> : vector<64x256xf32>
    %7 = tpu.matmul %5, %6, %cst_9 {dimension_numbers = #tpu.dot_dimension_numbers<[1], [0], [0], [1], [0, 0, 1, 1], [], []>} : vector<64x5xf32>, vector<5x256xf32>, vector<64x256xf32> -> vector<64x256xf32>
    %8 = tpu.iota {dimensions = array<i32: 0>} : vector<64x256xi32>
    %cst_10 = arith.constant dense<0x7F800000> : vector<256xf32>
    %9 = vector.multi_reduction <minimumf>, %7, %cst_10 [0] : vector<64x256xf32> to vector<256xf32>
    %10 = vector.shape_cast %9 : vector<256xf32> to vector<1x256xf32>
    %11 = vector.broadcast %10 : vector<1x256xf32> to vector<64x256xf32>
    %12 = arith.cmpf oeq, %7, %11 : vector<64x256xf32>
    %c64_i32 = arith.constant 64 : i32
    %13 = vector.broadcast %c64_i32 : i32 to vector<64x256xi32>
    %14 = arith.select %12, %8, %13 : vector<64x256xi1>, vector<64x256xi32>
    %cst_11 = arith.constant dense<2147483647> : vector<256xi32>
    %15 = vector.multi_reduction <minsi>, %14, %cst_11 [0] : vector<64x256xi32> to vector<256xi32>
    %16 = vector.shape_cast %15 : vector<256xi32> to vector<1x256xi32>
    %17 = vector.broadcast %16 : vector<1x256xi32> to vector<64x256xi32>
    %18 = arith.cmpi eq, %8, %17 : vector<64x256xi32>
    %19 = arith.extui %18 : vector<64x256xi1> to vector<64x256xi32>
    %20 = arith.sitofp %19 : vector<64x256xi32> to vector<64x256xf32>
    %c0_12 = arith.constant 0 : index
    %c0_13 = arith.constant 0 : index
    %21 = vector.load %arg4[%c0_12, %c0_13] : memref<4x64xf32, #tpu.memory_space<vmem>>, vector<4x64xf32>
    %cst_14 = arith.constant dense<0.000000e+00> : vector<4x256xf32>
    %22 = tpu.matmul %21, %20, %cst_14 {dimension_numbers = #tpu.dot_dimension_numbers<[1], [0], [0], [1], [0, 0, 1, 1], [], []>} : vector<4x64xf32>, vector<64x256xf32>, vector<4x256xf32> -> vector<4x256xf32>
    %c0_15 = arith.constant 0 : index
    %c0_16 = arith.constant 0 : index
    %c0_17 = arith.constant 0 : index
    %23 = vector.load %arg5[%c0_15, %c0_16, %c0_17] : memref<1x4x256xf32, #tpu.memory_space<vmem>>, vector<1x4x256xf32>
    %24 = vector.shape_cast %23 : vector<1x4x256xf32> to vector<4x256xf32>
    %25 = vector.shape_cast %22 : vector<4x256xf32> to vector<1x4x256xf32>
    tpu.vector_store %arg5[%c0_15, %c0_16, %c0_17], %25 {strides = array<i32>} : memref<1x4x256xf32, #tpu.memory_space<vmem>>, vector<1x4x256xf32>,
    %26 = arith.mulf %1, %1 : vector<4x256xf32>
    %cst_18 = arith.constant dense<0.000000e+00> : vector<256xf32>
    %27 = vector.multi_reduction <add>, %26, %cst_18 [0] : vector<4x256xf32> to vector<256xf32>
    %28 = vector.shape_cast %27 : vector<256xf32> to vector<1x256xf32>
    %29 = arith.addf %10, %28 : vector<1x256xf32>
    %30 = vector.shape_cast %29 : vector<1x256xf32> to vector<1x1x256xf32>
    %cst_19 = arith.constant dense<0.000000e+00> : vector<1xf32>
    %31 = vector.multi_reduction <add>, %30, %cst_19 [1, 2] : vector<1x1x256xf32> to vector<1xf32>
    %32 = vector.shape_cast %31 : vector<1xf32> to vector<1x1x1xf32>
    %33 = vector.extract %32[0, 0, 0] : f32 from vector<1x1x1xf32>
    %34 = vector.broadcast %33 : f32 to vector<1x1x1x1xf32>
    %35 = vector.shape_cast %34 : vector<1x1x1x1xf32> to vector<1x1x1x1xf32>
    %36 = vector.broadcast %35 : vector<1x1x1x1xf32> to vector<1x1x1x128xf32>
    %c0_20 = arith.constant 0 : index
    %c0_21 = arith.constant 0 : index
    %c0_22 = arith.constant 0 : index
    %c0_23 = arith.constant 0 : index
    %37 = vector.load %arg6[%c0_20, %c0_21, %c0_22, %c0_23] : memref<1x1x1x128xf32, #tpu.memory_space<vmem>>, vector<1x1x1x128xf32>
    tpu.vector_store %arg6[%c0_20, %c0_21, %c0_22, %c0_23], %36 {strides = array<i32>} : memref<1x1x1x128xf32, #tpu.memory_space<vmem>>, vector<1x1x1x128xf32>,
    return
  }
  func.func @transform_0(%arg0: i32, %arg1: i32) -> (i32, i32, i32) {
    %c0_i32 = arith.constant 0 : i32
    %c0_i32_0 = arith.constant 0 : i32
    return %arg0, %c0_i32, %arg1 : i32, i32, i32
  }
  func.func @transform_1(%arg0: i32, %arg1: i32) -> (i32, i32) {
    %c0_i32 = arith.constant 0 : i32
    %c0_i32_0 = arith.constant 0 : i32
    %c0_i32_1 = arith.constant 0 : i32
    return %c0_i32, %c0_i32_0 : i32, i32
  }
  func.func @transform_2(%arg0: i32, %arg1: i32) -> (i32, i32) {
    %c0_i32 = arith.constant 0 : i32
    %c0_i32_0 = arith.constant 0 : i32
    %c0_i32_1 = arith.constant 0 : i32
    return %c0_i32, %c0_i32_0 : i32, i32
  }
  func.func @transform_3(%arg0: i32, %arg1: i32) -> (i32, i32, i32) {
    %c0_i32 = arith.constant 0 : i32
    %c0_i32_0 = arith.constant 0 : i32
    return %arg0, %c0_i32, %arg1 : i32, i32, i32
  }
  func.func @transform_4(%arg0: i32, %arg1: i32) -> (i32, i32, i32, i32) {
    %c0_i32 = arith.constant 0 : i32
    %c0_i32_0 = arith.constant 0 : i32
    %c0_i32_1 = arith.constant 0 : i32
    return %arg0, %arg1, %c0_i32, %c0_i32_0 : i32, i32, i32, i32
  }
}

</mosaic_0001>

<llo_original>
// kernel: vector_quantizer_forward.1
$region0: #{vector_quantizer_forward.1}
  #allocation0 [shape = 'u32[]', space=smem, size = 0x4, offset = 0x4, fixed_abs, tag = 'smem constant byte address 0x4 - core index']
  #allocation1 [shape = 'u32[72,128]{1,0:T(1,128)}', space=vmem, size = 0x9000, scoped, tag = 'internal scratch']
  #allocation2 [shape = 'f32[5,256]{1,0:T(8,128)}', space=vmem, size = 0x2000, scoped, tag = 'scratch operand']
  %s0 = inlined_call_operand.vmem [shape: f32[2,4,256], index: 0, kind: input, shape index: {}]
  %s1 = inlined_call_operand.vmem [shape: f32[64,5], index: 1, kind: input, shape index: {}]
  %s2 = inlined_call_operand.vmem [shape: f32[4,64], index: 2, kind: input, shape index: {}]
  %s3 = inlined_call_operand.vmem [shape: f32[2,4,256], index: 3, kind: output, shape index: {0}]
  %s4 = inlined_call_operand.vmem [shape: f32[2,1,1,128], index: 4, kind: output, shape index: {1}]
  %5 = xla_tuple %s3, %s4
  %s6 = sld [smem:[#allocation0]]
  $region53: #{vector_quantizer_forward.1} parent=0
    _
  %s8 = ssub.s32 1, %s6
  %s9 = scalar_select 0, %s8, %s6
  loop: start=0, step=1, limit=4
  $region2: #{vector_quantizer_forward.1} parent=0 // loop_pre_header
    _
  $region3: #{vector_quantizer_forward.1} parent=0 // loop_header
    %s11 = sphi 0, %s15
    %p12 = scmp.ge.s32.totalorder %s11, 4
    %s18 = sphi 0, %s30
    %s19 = sphi 0, %s26
    %s20 = sphi 0, %s18
    %s21 = sphi 0, %s19
    %s22 = sphi 0, %s20
    %s23 = sphi 0, %s21
    %s35 = sphi 0, %s37
    %s38 = sphi 0, %s35
    %s39 = sphi 0, %s38
    %s55 = sphi 0, %s39
    %s59 = sphi 0, %s59
    %s61 = sphi 0, %s59
    %s62 = sphi 0, %s61
    %s76 = sphi 0, %s62
    %s80 = sphi 0, %s80
    %s82 = sphi 0, %s80
    %s83 = sphi 0, %s82
    %s97 = sphi 0, %s83
    %s105 = sphi 0, %s107
    %s108 = sphi 0, %s105
    %s109 = sphi 0, %s108
    %s125 = sphi 0, %s109
    %s133 = sphi 0, %s135
    %s136 = sphi 0, %s133
    %s137 = sphi 0, %s136
    %s153 = sphi 0, %s137
  $region4: #{vector_quantizer_forward.1} parent=0 // loop_header_branch
    %14 = sbr.rel (%p12) target = $region8
  $region5: #{vector_quantizer_forward.1} parent=0 // loop_body
    %s16 = ssub.s32 %s11, 1
    %s17 = ssub.s32 %s11, 2
    %s24 = sadd.s32 1, %s19
    %p25 = scmp.ge.s32.totalorder %s24, 1
    %s26 = scalar_select %p25, 0, %s24
    %s27 = sadd.s32 1, %s18
    %s28 = scalar_select %p25, %s27, %s18
    %p29 = scmp.ge.s32.totalorder %s28, 2
    %s30 = scalar_select %p29, 0, %s28
    %s31 = ssub.s32 %s18, %s30
    %s32 = ssub.s32 %s19, %s26
    %s33 = sor.u32 %s31, %s32
    %p34 = scmp.eq.s32.totalorder %s33, 0
    %s36 = sadd.s32 %s35, 1
    %s37 = scalar_select %p34, %s35, %s36
    %p40 = pneg %p34
    %p41 = scmp.eq.s32.totalorder %s11, 1
    %p42 = por %p40, %p41
    %p43 = scmp.ne.s32.totalorder %s35, %s38
    %p44 = scmp.eq.s32.totalorder %s11, 0
    %p45 = por %p43, %p44
    %p46 = scmp.ne.s32.totalorder %s35, %s38
    %p47 = scmp.eq.s32.totalorder %s16, 1
    %p48 = por %p46, %p47
    %p49 = scmp.ne.s32.totalorder %s38, %s39
    %p50 = scmp.eq.s32.totalorder %s16, 0
    %p51 = por %p49, %p50
    %p52 = scmp.ne.s32.totalorder %s38, %s39
    %p53 = scmp.eq.s32.totalorder %s17, 1
    %p54 = por %p52, %p53
    %p56 = scmp.ne.s32.totalorder %s39, %s55
    %p57 = scmp.eq.s32.totalorder %s17, 0
    %p58 = por %p56, %p57
    %s60 = sadd.s32 %s59, 1
    %p63 = scmp.eq.s32.totalorder %s11, 1
    %p64 = scmp.ne.s32.totalorder %s59, %s61
    %p65 = scmp.eq.s32.totalorder %s11, 0
    %p66 = por %p64, %p65
    %p67 = scmp.ne.s32.totalorder %s59, %s61
    %p68 = scmp.eq.s32.totalorder %s16, 1
    %p69 = por %p67, %p68
    %p70 = scmp.ne.s32.totalorder %s61, %s62
    %p71 = scmp.eq.s32.totalorder %s16, 0
    %p72 = por %p70, %p71
    %p73 = scmp.ne.s32.totalorder %s61, %s62
    %p74 = scmp.eq.s32.totalorder %s17, 1
    %p75 = por %p73, %p74
    %p77 = scmp.ne.s32.totalorder %s62, %s76
    %p78 = scmp.eq.s32.totalorder %s17, 0
    %p79 = por %p77, %p78
    %s81 = sadd.s32 %s80, 1
    %p84 = scmp.eq.s32.totalorder %s11, 1
    %p85 = scmp.ne.s32.totalorder %s80, %s82
    %p86 = scmp.eq.s32.totalorder %s11, 0
    %p87 = por %p85, %p86
    %p88 = scmp.ne.s32.totalorder %s80, %s82
    %p89 = scmp.eq.s32.totalorder %s16, 1
    %p90 = por %p88, %p89
    %p91 = scmp.ne.s32.totalorder %s82, %s83
    %p92 = scmp.eq.s32.totalorder %s16, 0
    %p93 = por %p91, %p92
    %p94 = scmp.ne.s32.totalorder %s82, %s83
    %p95 = scmp.eq.s32.totalorder %s17, 1
    %p96 = por %p94, %p95
    %p98 = scmp.ne.s32.totalorder %s83, %s97
    %p99 = scmp.eq.s32.totalorder %s17, 0
    %p100 = por %p98, %p99
    %s101 = ssub.s32 %s18, %s30
    %s102 = ssub.s32 %s19, %s26
    %s103 = sor.u32 %s101, %s102
    %p104 = scmp.eq.s32.totalorder %s103, 0
    %s106 = sadd.s32 %s105, 1
    %s107 = scalar_select %p104, %s105, %s106
    %p110 = pneg %p104
    %p111 = scmp.eq.s32.totalorder %s11, 1
    %p112 = por %p110, %p111
    %p113 = scmp.ne.s32.totalorder %s105, %s108
    %p114 = scmp.eq.s32.totalorder %s11, 0
    %p115 = por %p113, %p114
    %p116 = scmp.ne.s32.totalorder %s105, %s108
    %p117 = scmp.eq.s32.totalorder %s16, 1
    %p118 = por %p116, %p117
    %p119 = scmp.ne.s32.totalorder %s108, %s109
    %p120 = scmp.eq.s32.totalorder %s16, 0
    %p121 = por %p119, %p120
    %p122 = scmp.ne.s32.totalorder %s108, %s109
    %p123 = scmp.eq.s32.totalorder %s17, 1
    %p124 = por %p122, %p123
    %p126 = scmp.ne.s32.totalorder %s109, %s125
    %p127 = scmp.eq.s32.totalorder %s17, 0
    %p128 = por %p126, %p127
    %s129 = ssub.s32 %s18, %s30
    %s130 = ssub.s32 %s19, %s26
    %s131 = sor.u32 %s129, %s130
    %p132 = scmp.eq.s32.totalorder %s131, 0
    %s134 = sadd.s32 %s133, 1
    %s135 = scalar_select %p132, %s133, %s134
    %p138 = pneg %p132
    %p139 = scmp.eq.s32.totalorder %s11, 1
    %p140 = por %p138, %p139
    %p141 = scmp.ne.s32.totalorder %s133, %s136
    %p142 = scmp.eq.s32.totalorder %s11, 0
    %p143 = por %p141, %p142
    %p144 = scmp.ne.s32.totalorder %s133, %s136
    %p145 = scmp.eq.s32.totalorder %s16, 1
    %p146 = por %p144, %p145
    %p147 = scmp.ne.s32.totalorder %s136, %s137
    %p148 = scmp.eq.s32.totalorder %s16, 0
    %p149 = por %p147, %p148
    %p150 = scmp.ne.s32.totalorder %s136, %s137
    %p151 = scmp.eq.s32.totalorder %s17, 1
    %p152 = por %p150, %p151
    %p154 = scmp.ne.s32.totalorder %s137, %s153
    %p155 = scmp.eq.s32.totalorder %s17, 0
    %p156 = por %p154, %p155
    %p157 = scmp.le.s32.totalorder 1, %s11
    %p158 = scmp.lt.s32.totalorder %s11, 3
    %p159 = pnand %p157, %p158
    %p160 = pneg %p159
    // Predicated region
    $region9: #{vector_quantizer_forward.1} parent=5 // pred_check
      _
    $region10: #{vector_quantizer_forward.1} parent=5 // pred_check_branch
      %162 = sbr.rel (%p159) target = $region12
    $region11: #{vector_quantizer_forward.1} parent=5 // pred_region
      %s163 = ssub.s32 %s11, 1
      // Predicated region
      $region13: #{vector_quantizer_forward.1} parent=11 // pred_check
        %p164 = pneg %p72
      $region14: #{vector_quantizer_forward.1} parent=11 // pred_check_branch
        %166 = sbr.rel (%p164) target = $region16
      $region15: #{vector_quantizer_forward.1} parent=11 // pred_region
        _
      $region16: #{vector_quantizer_forward.1} parent=11 // pred_fallthru
        _
      // Predicated region
      $region17: #{vector_quantizer_forward.1} parent=11 // pred_check
        %p167 = pneg %p93
      $region18: #{vector_quantizer_forward.1} parent=11 // pred_check_branch
        %169 = sbr.rel (%p167) target = $region20
      $region19: #{vector_quantizer_forward.1} parent=11 // pred_region
        _
      $region20: #{vector_quantizer_forward.1} parent=11 // pred_fallthru
        _
    $region12: #{vector_quantizer_forward.1} parent=5 // pred_fallthru
      _
    %p170 = scmp.lt.s32.totalorder %s11, 2
    // Predicated region
    $region21: #{vector_quantizer_forward.1} parent=5 // pred_check
      %p171 = pneg %p170
    $region22: #{vector_quantizer_forward.1} parent=5 // pred_check_branch
      %173 = sbr.rel (%p171) target = $region24
    $region23: #{vector_quantizer_forward.1} parent=5 // pred_region
      // Predicated region
      $region25: #{vector_quantizer_forward.1} parent=23 // pred_check
        %p174 = pneg %p45
      $region26: #{vector_quantizer_forward.1} parent=23 // pred_check_branch
        %176 = sbr.rel (%p174) target = $region28
      $region27: #{vector_quantizer_forward.1} parent=23 // pred_region
        %s177 = smul.u32 2, %s19
        %p178 = scmp.lt.s32.totalorder %s18, 1
        %s179 = scalar_select %p178, %s18, 1
        %p180 = scmp.lt.s32.totalorder %s177, 1
        %s181 = scalar_select %p180, %s177, 1
        %s182 = smul.addr %s179, 2
        %s183 = sadd.s32 %s181, %s182
        %s184 = smul.addr %s183, 4
        %s185 = scalar_lea.vmem %s0, %s184
        %s186 = smul.u32 2, %s19
      $region28: #{vector_quantizer_forward.1} parent=23 // pred_fallthru
        _
    $region24: #{vector_quantizer_forward.1} parent=5 // pred_fallthru
      _
    %p187 = scmp.le.s32.totalorder 1, %s11
    %p188 = scmp.lt.s32.totalorder %s11, 3
    %p189 = pnand %p187, %p188
    %p190 = pneg %p189
    // Predicated region
    $region29: #{vector_quantizer_forward.1} parent=5 // pred_check
      _
    $region30: #{vector_quantizer_forward.1} parent=5 // pred_check_branch
      %192 = sbr.rel (%p189) target = $region32
    $region31: #{vector_quantizer_forward.1} parent=5 // pred_region
      %s193 = ssub.s32 %s11, 1
      %s194 = smul.u32 2, %s21
      %p195 = scmp.lt.s32.totalorder %s20, 1
      %s196 = scalar_select %p195, %s20, 1
      %p197 = scmp.lt.s32.totalorder %s194, 1
      %s198 = scalar_select %p197, %s194, 1
      %s199 = smul.addr %s196, 2
      %s200 = sadd.s32 %s198, %s199
      %s201 = smul.addr %s200, 4
      %s202 = scalar_lea.vmem %s0, %s201
      %p203 = pneg %p51
      %p204 = pneg %p48
      %p205 = pneg %p72
      %p206 = pneg %p69
      %p207 = pneg %p93
      %p208 = pneg %p90
      %p209 = pneg %p121
      %p210 = pneg %p118
      %s211 = smul.u32 2, %s21
      %p212 = scmp.lt.s32.totalorder %s20, 1
      %s213 = scalar_select %p212, %s20, 1
      %p214 = scmp.lt.s32.totalorder %s211, 1
      %s215 = scalar_select %p214, %s211, 1
      %s216 = smul.addr %s213, 2
      %s217 = sadd.s32 %s215, %s216
      %s218 = smul.addr %s217, 4
      %s219 = scalar_lea.vmem %s3, %s218
      %p220 = pneg %p149
      %p221 = pneg %p146
      %p222 = scmp.lt.s32.totalorder %s20, 1
      %s223 = scalar_select %p222, %s20, 1
      %p224 = scmp.lt.s32.totalorder %s21, 0
      %s225 = scalar_select %p224, %s21, 0
      %s226 = sadd.s32 %s225, %s223
      %s227 = scalar_lea.vmem %s4, %s226
      %s228 = smul.u32 2, %s21
      %p229 = scmp.lt.s32.totalorder %s20, 1
      %s230 = scalar_select %p229, %s20, 1
      %p231 = scmp.lt.s32.totalorder %s228, 1
      %s232 = scalar_select %p231, %s228, 1
      %s233 = smul.addr %s230, 2
      %s234 = sadd.s32 %s232, %s233
      %s235 = smul.addr %s234, 4
      %s236 = scalar_lea.vmem %s0, %s235
      %s237 = smul.u32 2, %s21
      %s238 = smul.u32 2, %s21
      %p239 = scmp.lt.s32.totalorder %s20, 1
      %s240 = scalar_select %p239, %s20, 1
      %p241 = scmp.lt.s32.totalorder %s238, 1
      %s242 = scalar_select %p241, %s238, 1
      %s243 = smul.addr %s240, 2
      %s244 = sadd.s32 %s242, %s243
      %s245 = smul.addr %s244, 4
      %s246 = scalar_lea.vmem %s3, %s245
      %s247 = smul.u32 2, %s21
      %p248 = scmp.lt.s32.totalorder %s20, 1
      %s249 = scalar_select %p248, %s20, 1
      %p250 = scmp.lt.s32.totalorder %s21, 0
      %s251 = scalar_select %p250, %s21, 0
      %s252 = sadd.s32 %s251, %s249
      %s253 = scalar_lea.vmem %s4, %s252
      %v254 = vld [vmem:[%s236] sm:$0xff]
      %256 = vst [vmem:[#allocation1] ss:$2 sm:$0xff] %v254
      %v257 = vld.sshfl [vmem:[#allocation1] sm:$0xff pattern:$0x75316420]
      %v258 = vld.sshfl [vmem:[#allocation1 + $0x8] sm:$0xff pattern:$0x75316420]
      %261 = vst [vmem:[#allocation2] sm:$0xf] %v257
      %262 = vst [vmem:[#allocation2 + $0x8] sm:$0xf] %v258
      %v263 = vlaneseq
      %vm264 = vcmp.ge.s32.totalorder %v263, 0
      %vm265 = vcmp.lt.s32.totalorder %v263, 256
      %vm266 = vmand %vm264, %vm265
      %s267 = scalar_lea.vmem [#allocation2], 4
      %268 = vst.msk [vmem:[%s267] ss:$8 sm:$0x3] %vm266, 1.0
      %269 = vst.msk [vmem:[%s267] ss:$8 sm:$0x0] %vm266, 1.0
      %v270 = vld [vmem:[%s1] sm:$0xff]
      %v271 = vld [vmem:[%s1 + $0x8] sm:$0xff]
      %v272 = vld [vmem:[%s1 + $0x10] sm:$0xff]
      %v273 = vld [vmem:[%s1 + $0x18] sm:$0xff]
      %v274 = vld [vmem:[%s1 + $0x20] sm:$0xff]
      %v275 = vld [vmem:[%s1 + $0x28] sm:$0xff]
      %v276 = vld [vmem:[%s1 + $0x30] sm:$0xff]
      %v277 = vld [vmem:[%s1 + $0x38] sm:$0xff]
      %v278 = vld [vmem:[#allocation2] sm:$0x1f]
      %v279 = vld [vmem:[#allocation2 + $0x8] sm:$0x1f]
      %vm280 = vcmask 39936
      %v282 = vsel %vm280, %v270, 0
      %v285 = vsel %vm280, %v271, 0
      %v288 = vsel %vm280, %v272, 0
      %v291 = vsel %vm280, %v273, 0
      %v294 = vsel %vm280, %v274, 0
      %v297 = vsel %vm280, %v275, 0
      %v300 = vsel %vm280, %v276, 0
      %v303 = vsel %vm280, %v277, 0
      %vm305 = vcmask 1044480
      %v307 = vsel %vm305, %v278, 0
      %v310 = vsel %vm305, %v279, 0
      %312 = vmatpush.msra.mxu0 0.0
      %313 = vmatpush.msra.mxu0 0.0
      %314 = vmatpush.msra.mxu0 0.0
      %315 = vmatpush.msra.mxu0 0.0
      %316 = vmatpush.msra.mxu0 0.0
      %317 = vmatpush.msra.mxu0 0.0
      %318 = vmatpush.msra.mxu0 0.0
      %319 = vmatpush.msra.mxu0 0.0
      %320 = vmatpush.msra.mxu0 0.0
      %321 = vmatpush.msra.mxu0 0.0
      %322 = vmatpush.msra.mxu0 0.0
      %323 = vmatpush.msra.mxu0 0.0
      %324 = vmatpush.msra.mxu0 0.0
      %325 = vmatpush.msra.mxu0 0.0
      %326 = vmatpush.msra.mxu0 0.0
      %327 = vmatpush.msra.mxu0 %v307
      %328 = vmatmul.f32.gmra.mxu0 %v282
      %v329 = vpop.f32.mrf.mxu0
      %v330 = vadd.f32 0.0, %v329
      %331 = vmatmul.f32.gmra.mxu0 %v285
      %v332 = vpop.f32.mrf.mxu0
      %v333 = vadd.f32 0.0, %v332
      %334 = vmatmul.f32.gmra.mxu0 %v288
      %v335 = vpop.f32.mrf.mxu0
      %v336 = vadd.f32 0.0, %v335
      %337 = vmatmul.f32.gmra.mxu0 %v291
      %v338 = vpop.f32.mrf.mxu0
      %v339 = vadd.f32 0.0, %v338
      %340 = vmatmul.f32.gmra.mxu0 %v294
      %v341 = vpop.f32.mrf.mxu0
      %v342 = vadd.f32 0.0, %v341
      %343 = vmatmul.f32.gmra.mxu0 %v297
      %v344 = vpop.f32.mrf.mxu0
      %v345 = vadd.f32 0.0, %v344
      %346 = vmatmul.f32.gmra.mxu0 %v300
      %v347 = vpop.f32.mrf.mxu0
      %v348 = vadd.f32 0.0, %v347
      %349 = vmatmul.f32.gmra.mxu0 %v303
      %v350 = vpop.f32.mrf.mxu0
      %v351 = vadd.f32 0.0, %v350
      %352 = vdwg.mxu0
      %353 = vmatpush.msra.mxu0 0.0
      %354 = vmatpush.msra.mxu0 0.0
      %355 = vmatpush.msra.mxu0 0.0
      %356 = vmatpush.msra.mxu0 0.0
      %357 = vmatpush.msra.mxu0 0.0
      %358 = vmatpush.msra.mxu0 0.0
      %359 = vmatpush.msra.mxu0 0.0
      %360 = vmatpush.msra.mxu0 0.0
      %361 = vmatpush.msra.mxu0 0.0
      %362 = vmatpush.msra.mxu0 0.0
      %363 = vmatpush.msra.mxu0 0.0
      %364 = vmatpush.msra.mxu0 0.0
      %365 = vmatpush.msra.mxu0 0.0
      %366 = vmatpush.msra.mxu0 0.0
      %367 = vmatpush.msra.mxu0 0.0
      %368 = vmatpush.msra.mxu0 %v310
      %369 = vmatmul.f32.gmra.mxu0 %v282
      %v370 = vpop.f32.mrf.mxu0
      %v371 = vadd.f32 0.0, %v370
      %372 = vmatmul.f32.gmra.mxu0 %v285
      %v373 = vpop.f32.mrf.mxu0
      %v374 = vadd.f32 0.0, %v373
      %375 = vmatmul.f32.gmra.mxu0 %v288
      %v376 = vpop.f32.mrf.mxu0
      %v377 = vadd.f32 0.0, %v376
      %378 = vmatmul.f32.gmra.mxu0 %v291
      %v379 = vpop.f32.mrf.mxu0
      %v380 = vadd.f32 0.0, %v379
      %381 = vmatmul.f32.gmra.mxu0 %v294
      %v382 = vpop.f32.mrf.mxu0
      %v383 = vadd.f32 0.0, %v382
      %384 = vmatmul.f32.gmra.mxu0 %v297
      %v385 = vpop.f32.mrf.mxu0
      %v386 = vadd.f32 0.0, %v385
      %387 = vmatmul.f32.gmra.mxu0 %v300
      %v388 = vpop.f32.mrf.mxu0
      %v389 = vadd.f32 0.0, %v388
      %390 = vmatmul.f32.gmra.mxu0 %v303
      %v391 = vpop.f32.mrf.mxu0
      %v392 = vadd.f32 0.0, %v391
      %393 = vdwg.mxu0
      %v394 = vlaneseq
      %v395 = vshrl.u32 %v394, 7
      %v396 = vadd.s32 %v395, 8
      %v397 = vadd.s32 %v395, 16
      %v398 = vadd.s32 %v395, 24
      %v399 = vadd.s32 %v395, 32
      %v400 = vadd.s32 %v395, 40
      %v401 = vadd.s32 %v395, 48
      %v402 = vadd.s32 %v395, 56
      %v403 = vmin.f32 %v330, %v336
      %v404 = vmin.f32 %v333, %v339
      %v405 = vmin.f32 %v403, %v342
      %v406 = vmin.f32 %v404, %v345
      %v407 = vmin.f32 %v405, %v348
      %v408 = vmin.f32 %v406, %v351
      %v409 = vmin.f32 %v407, %v408
      %v410 = vrot.slane %v409, 4
      %v411 = vmin.f32 %v409, %v410
      %v412 = vrot.slane %v411, 2
      %v413 = vmin.f32 %v411, %v412
      %v414 = vrot.slane %v413, 1
      %v415 = vmin.f32 %v413, %v414
      %v416 = vmin.f32 %v371, %v377
      %v417 = vmin.f32 %v374, %v380
      %v418 = vmin.f32 %v416, %v383
      %v419 = vmin.f32 %v417, %v386
      %v420 = vmin.f32 %v418, %v389
      %v421 = vmin.f32 %v419, %v392
      %v422 = vmin.f32 %v420, %v421
      %v423 = vrot.slane %v422, 4
      %v424 = vmin.f32 %v422, %v423
      %v425 = vrot.slane %v424, 2
      %v426 = vmin.f32 %v424, %v425
      %v427 = vrot.slane %v426, 1
      %v428 = vmin.f32 %v426, %v427
      %vm429 = vcmp.eq.f32.partialorder %v330, %v415
      %vm430 = vcmp.eq.f32.partialorder %v371, %v428
      %vm431 = vcmp.eq.f32.partialorder %v333, %v415
      %vm432 = vcmp.eq.f32.partialorder %v374, %v428
      %vm433 = vcmp.eq.f32.partialorder %v336, %v415
      %vm434 = vcmp.eq.f32.partialorder %v377, %v428
      %vm435 = vcmp.eq.f32.partialorder %v339, %v415
      %vm436 = vcmp.eq.f32.partialorder %v380, %v428
      %vm437 = vcmp.eq.f32.partialorder %v342, %v415
      %vm438 = vcmp.eq.f32.partialorder %v383, %v428
      %vm439 = vcmp.eq.f32.partialorder %v345, %v415
      %vm440 = vcmp.eq.f32.partialorder %v386, %v428
      %vm441 = vcmp.eq.f32.partialorder %v348, %v415
      %vm442 = vcmp.eq.f32.partialorder %v389, %v428
      %vm443 = vcmp.eq.f32.partialorder %v351, %v415
      %vm444 = vcmp.eq.f32.partialorder %v392, %v428
      %v445 = vsel %vm429, %v395, 64
      %v446 = vsel %vm430, %v395, 64
      %v447 = vsel %vm431, %v396, 64
      %v448 = vsel %vm432, %v396, 64
      %v449 = vsel %vm433, %v397, 64
      %v450 = vsel %vm434, %v397, 64
      %v451 = vsel %vm435, %v398, 64
      %v452 = vsel %vm436, %v398, 64
      %v453 = vsel %vm437, %v399, 64
      %v454 = vsel %vm438, %v399, 64
      %v455 = vsel %vm439, %v400, 64
      %v456 = vsel %vm440, %v400, 64
      %v457 = vsel %vm441, %v401, 64
      %v458 = vsel %vm442, %v401, 64
      %v459 = vsel %vm443, %v402, 64
      %v460 = vsel %vm444, %v402, 64
      %vm461 = vcmp.lt.s32.totalorder %v445, %v449
      %v462 = vsel %vm461, %v445, %v449
      %vm463 = vcmp.lt.s32.totalorder %v447, %v451
      %v464 = vsel %vm463, %v447, %v451
      %vm465 = vcmp.lt.s32.totalorder %v462, %v453
      %v466 = vsel %vm465, %v462, %v453
      %vm467 = vcmp.lt.s32.totalorder %v464, %v455
      %v468 = vsel %vm467, %v464, %v455
      %vm469 = vcmp.lt.s32.totalorder %v466, %v457
      %v470 = vsel %vm469, %v466, %v457
      %vm471 = vcmp.lt.s32.totalorder %v468, %v459
      %v472 = vsel %vm471, %v468, %v459
      %vm473 = vcmp.lt.s32.totalorder %v470, %v472
      %v474 = vsel %vm473, %v470, %v472
      %v475 = vrot.slane %v474, 4
      %vm476 = vcmp.lt.s32.totalorder %v474, %v475
      %v477 = vsel %vm476, %v474, %v475
      %v478 = vrot.slane %v477, 2
      %vm479 = vcmp.lt.s32.totalorder %v477, %v478
      %v480 = vsel %vm479, %v477, %v478
      %v481 = vrot.slane %v480, 1
      %vm482 = vcmp.lt.s32.totalorder %v480, %v481
      %v483 = vsel %vm482, %v480, %v481
      %vm484 = vcmp.lt.s32.totalorder %v446, %v450
      %v485 = vsel %vm484, %v446, %v450
      %vm486 = vcmp.lt.s32.totalorder %v448, %v452
      %v487 = vsel %vm486, %v448, %v452
      %vm488 = vcmp.lt.s32.totalorder %v485, %v454
      %v489 = vsel %vm488, %v485, %v454
      %vm490 = vcmp.lt.s32.totalorder %v487, %v456
      %v491 = vsel %vm490, %v487, %v456
      %vm492 = vcmp.lt.s32.totalorder %v489, %v458
      %v493 = vsel %vm492, %v489, %v458
      %vm494 = vcmp.lt.s32.totalorder %v491, %v460
      %v495 = vsel %vm494, %v491, %v460
      %vm496 = vcmp.lt.s32.totalorder %v493, %v495
      %v497 = vsel %vm496, %v493, %v495
      %v498 = vrot.slane %v497, 4
      %vm499 = vcmp.lt.s32.totalorder %v497, %v498
      %v500 = vsel %vm499, %v497, %v498
      %v501 = vrot.slane %v500, 2
      %vm502 = vcmp.lt.s32.totalorder %v500, %v501
      %v503 = vsel %vm502, %v500, %v501
      %v504 = vrot.slane %v503, 1
      %vm505 = vcmp.lt.s32.totalorder %v503, %v504
      %v506 = vsel %vm505, %v503, %v504
      %vm507 = vcmp.eq.s32.totalorder %v395, %v483
      %vm508 = vcmp.eq.s32.totalorder %v395, %v506
      %vm509 = vcmp.eq.s32.totalorder %v396, %v483
      %vm510 = vcmp.eq.s32.totalorder %v396, %v506
      %vm511 = vcmp.eq.s32.totalorder %v397, %v483
      %vm512 = vcmp.eq.s32.totalorder %v397, %v506
      %vm513 = vcmp.eq.s32.totalorder %v398, %v483
      %vm514 = vcmp.eq.s32.totalorder %v398, %v506
      %vm515 = vcmp.eq.s32.totalorder %v399, %v483
      %vm516 = vcmp.eq.s32.totalorder %v399, %v506
      %vm517 = vcmp.eq.s32.totalorder %v400, %v483
      %vm518 = vcmp.eq.s32.totalorder %v400, %v506
      %vm519 = vcmp.eq.s32.totalorder %v401, %v483
      %vm520 = vcmp.eq.s32.totalorder %v401, %v506
      %vm521 = vcmp.eq.s32.totalorder %v402, %v483
      %vm522 = vcmp.eq.s32.totalorder %v402, %v506
      %v523 = vsel %vm507, 1, 0
      %v524 = vsel %vm508, 1, 0
      %v525 = vsel %vm509, 1, 0
      %v526 = vsel %vm510, 1, 0
      %v527 = vsel %vm511, 1, 0
      %v528 = vsel %vm512, 1, 0
      %v529 = vsel %vm513, 1, 0
      %v530 = vsel %vm514, 1, 0
      %v531 = vsel %vm515, 1, 0
      %v532 = vsel %vm516, 1, 0
      %v533 = vsel %vm517, 1, 0
      %v534 = vsel %vm518, 1, 0
      %v535 = vsel %vm519, 1, 0
      %v536 = vsel %vm520, 1, 0
      %v537 = vsel %vm521, 1, 0
      %v538 = vsel %vm522, 1, 0
      %v539 = vcvt.s32.f32 %v523
      %v540 = vcvt.s32.f32 %v524
      %v541 = vcvt.s32.f32 %v525
      %v542 = vcvt.s32.f32 %v526
      %v543 = vcvt.s32.f32 %v527
      %v544 = vcvt.s32.f32 %v528
      %v545 = vcvt.s32.f32 %v529
      %v546 = vcvt.s32.f32 %v530
      %v547 = vcvt.s32.f32 %v531
      %v548 = vcvt.s32.f32 %v532
      %v549 = vcvt.s32.f32 %v533
      %v550 = vcvt.s32.f32 %v534
      %v551 = vcvt.s32.f32 %v535
      %v552 = vcvt.s32.f32 %v536
      %v553 = vcvt.s32.f32 %v537
      %v554 = vcvt.s32.f32 %v538
      %v555 = vld [vmem:[%s2] sm:$0xf]
      %vm556 = vcmask 523264
      %v558 = vsel %vm556, %v555, 0
      %560 = vmatpush.msra.mxu0 0.0
      %561 = vmatpush.msra.mxu0 0.0
      %562 = vmatpush.msra.mxu0 0.0
      %563 = vmatpush.msra.mxu0 0.0
      %564 = vmatpush.msra.mxu0 0.0
      %565 = vmatpush.msra.mxu0 0.0
      %566 = vmatpush.msra.mxu0 0.0
      %567 = vmatpush.msra.mxu0 0.0
      %568 = vmatpush.msra.mxu0 %v553
      %569 = vmatpush.msra.mxu0 %v551
      %570 = vmatpush.msra.mxu0 %v549
      %571 = vmatpush.msra.mxu0 %v547
      %572 = vmatpush.msra.mxu0 %v545
      %573 = vmatpush.msra.mxu0 %v543
      %574 = vmatpush.msra.mxu0 %v541
      %575 = vmatpush.msra.mxu0 %v539
      %576 = vmatmul.f32.gmra.mxu0 %v558
      %v577 = vpop.f32.mrf.mxu0
      %v578 = vadd.f32 0.0, %v577
      %579 = vdwg.mxu0
      %580 = vmatpush.msra.mxu0 0.0
      %581 = vmatpush.msra.mxu0 0.0
      %582 = vmatpush.msra.mxu0 0.0
      %583 = vmatpush.msra.mxu0 0.0
      %584 = vmatpush.msra.mxu0 0.0
      %585 = vmatpush.msra.mxu0 0.0
      %586 = vmatpush.msra.mxu0 0.0
      %587 = vmatpush.msra.mxu0 0.0
      %588 = vmatpush.msra.mxu0 %v554
      %589 = vmatpush.msra.mxu0 %v552
      %590 = vmatpush.msra.mxu0 %v550
      %591 = vmatpush.msra.mxu0 %v548
      %592 = vmatpush.msra.mxu0 %v546
      %593 = vmatpush.msra.mxu0 %v544
      %594 = vmatpush.msra.mxu0 %v542
      %595 = vmatpush.msra.mxu0 %v540
      %596 = vmatmul.f32.gmra.mxu0 %v558
      %v597 = vpop.f32.mrf.mxu0
      %v598 = vadd.f32 0.0, %v597
      %599 = vdwg.mxu0
      %v602 = vrot.slane %v598, 4
      %vm603 = vcmask 1043456
      %v604 = vsel %vm603, %v578, %v602
      %606 = vst [vmem:[%s246] sm:$0xff] %v604
      %v607 = vmul.f32 %v254, %v254
      %609 = vst [vmem:[#allocation1] ss:$2 sm:$0xff] %v607
      %v610 = vld.sshfl [vmem:[#allocation1] sm:$0xff pattern:$0x75316420]
      %v611 = vld.sshfl [vmem:[#allocation1 + $0x8] sm:$0xff pattern:$0x75316420]
      %v614 = vsel %vm603, %v610, 0.0
      %v615 = vrot.slane %v614, 4
      %v616 = vadd.f32 %v614, %v615
      %v617 = vrot.slane %v616, 2
      %v618 = vadd.f32 %v616, %v617
      %v619 = vrot.slane %v618, 1
      %v620 = vadd.f32 %v618, %v619
      %v621 = vsel %vm603, %v611, 0.0
      %v622 = vrot.slane %v621, 4
      %v623 = vadd.f32 %v621, %v622
      %v624 = vrot.slane %v623, 2
      %v625 = vadd.f32 %v623, %v624
      %v626 = vrot.slane %v625, 1
      %v627 = vadd.f32 %v625, %v626
      %v628 = vadd.f32 %v415, %v620
      %v629 = vadd.f32 %v428, %v627
      %vm630 = vcmask 1040384
      %v631 = vsel %vm630, %v628, 0.0
      %v632 = vsel %vm630, %v629, 0.0
      %v633 = vadd.f32 %v631, %v632
      %634 = vadd.xlane.f32.xlu0 %v633
      %v635 = vpop.xlane.xlu0 %634
      %v636 = vrot.slane %v635, 4
      %v637 = vadd.f32 %v635, %v636
      %v638 = vrot.slane %v637, 2
      %v639 = vadd.f32 %v637, %v638
      %v640 = vrot.slane %v639, 1
      %v641 = vadd.f32 %v639, %v640
      %s642 = vtos %v641
      %v643 = vstv %s642
      %644 = vst [vmem:[%s253] sm:$0x1] %v643
      %s645 = smul.u32 2, %s21
      %p646 = scmp.lt.s32.totalorder %s20, 1
      %s647 = scalar_select %p646, %s20, 1
      %p648 = scmp.lt.s32.totalorder %s645, 1
      %s649 = scalar_select %p648, %s645, 1
      %s650 = smul.addr %s647, 2
      %s651 = sadd.s32 %s649, %s650
      %s652 = smul.addr %s651, 4
      %s653 = scalar_lea.vmem %s3, %s652
      %p654 = scmp.lt.s32.totalorder %s20, 1
      %s655 = scalar_select %p654, %s20, 1
      %p656 = scmp.lt.s32.totalorder %s21, 0
      %s657 = scalar_select %p656, %s21, 0
      %s658 = sadd.s32 %s657, %s655
      %s659 = scalar_lea.vmem %s4, %s658
      // Predicated region
      $region33: #{vector_quantizer_forward.1} parent=31 // pred_check
        %p660 = pneg %p118
      $region34: #{vector_quantizer_forward.1} parent=31 // pred_check_branch
        %662 = sbr.rel (%p660) target = $region36
      $region35: #{vector_quantizer_forward.1} parent=31 // pred_region
        %s663 = smul.u32 2, %s21
      $region36: #{vector_quantizer_forward.1} parent=31 // pred_fallthru
        _
      // Predicated region
      $region37: #{vector_quantizer_forward.1} parent=31 // pred_check
        %p664 = pneg %p146
      $region38: #{vector_quantizer_forward.1} parent=31 // pred_check_branch
        %666 = sbr.rel (%p664) target = $region40
      $region39: #{vector_quantizer_forward.1} parent=31 // pred_region
        _
      $region40: #{vector_quantizer_forward.1} parent=31 // pred_fallthru
        _
    $region32: #{vector_quantizer_forward.1} parent=5 // pred_fallthru
      _
    %p667 = scmp.le.s32.totalorder 2, %s11
    // Predicated region
    $region41: #{vector_quantizer_forward.1} parent=5 // pred_check
      %p668 = pneg %p667
    $region42: #{vector_quantizer_forward.1} parent=5 // pred_check_branch
      %670 = sbr.rel (%p668) target = $region44
    $region43: #{vector_quantizer_forward.1} parent=5 // pred_region
      %s671 = ssub.s32 %s11, 2
      // Predicated region
      $region45: #{vector_quantizer_forward.1} parent=43 // pred_check
        %p672 = pneg %p124
      $region46: #{vector_quantizer_forward.1} parent=43 // pred_check_branch
        %674 = sbr.rel (%p672) target = $region48
      $region47: #{vector_quantizer_forward.1} parent=43 // pred_region
        %s675 = smul.u32 2, %s23
        %p676 = scmp.lt.s32.totalorder %s22, 1
        %s677 = scalar_select %p676, %s22, 1
        %p678 = scmp.lt.s32.totalorder %s675, 1
        %s679 = scalar_select %p678, %s675, 1
        %s680 = smul.addr %s677, 2
        %s681 = sadd.s32 %s679, %s680
        %s682 = smul.addr %s681, 4
        %s683 = scalar_lea.vmem %s3, %s682
      $region48: #{vector_quantizer_forward.1} parent=43 // pred_fallthru
        _
      // Predicated region
      $region49: #{vector_quantizer_forward.1} parent=43 // pred_check
        %p684 = pneg %p152
      $region50: #{vector_quantizer_forward.1} parent=43 // pred_check_branch
        %686 = sbr.rel (%p684) target = $region52
      $region51: #{vector_quantizer_forward.1} parent=43 // pred_region
        %p687 = scmp.lt.s32.totalorder %s22, 1
        %s688 = scalar_select %p687, %s22, 1
        %p689 = scmp.lt.s32.totalorder %s23, 0
        %s690 = scalar_select %p689, %s23, 0
        %s691 = sadd.s32 %s690, %s688
        %s692 = scalar_lea.vmem %s4, %s691
      $region52: #{vector_quantizer_forward.1} parent=43 // pred_fallthru
        _
    $region44: #{vector_quantizer_forward.1} parent=5 // pred_fallthru
      _
  $region6: #{vector_quantizer_forward.1} parent=0 // loop_footer
    %s15 = sadd.s32 1, %s11
  $region7: #{vector_quantizer_forward.1} parent=0 // loop_footer_branch
    %10 = sbr.rel target = $region3
  $region8: #{vector_quantizer_forward.1} parent=0 // loop_exit
    _

</llo_original>
